<compile_context>
chip_gen: v7x
topology: tpu7x:2x2x1
jax: 0.10.0
libtpu: 0.0.40
codegen_flags: <defaults>
</compile_context>

<pallas_src>
import jax
import jax.numpy as jnp
from jax.experimental import pallas as pl
from jax.experimental.pallas import tpu as pltpu

IN_DIM, H1, H2, OUT_DIM = 8, 64, 32, 30
OUT_PAD = 32          # layer-3 rows padded 30 -> 32 so in-kernel transposes stay 8-aligned
LANE = 128
DEF_BLOCK_CAP = 8192  # default max rows per grid step (amortizes ~0.35us step overhead)


def _round_up(n, m):
    return ((n + m - 1) // m) * m


def _tpu_topology():
    """Returns (tensorcores_per_device, vmem_limit_bytes_or_None); conservative fallback."""
    try:
        kind = jax.devices()[0].device_kind.lower()
    except Exception:
        return 1, None
    two_tc = ("v4" in kind) or ("v5p" in kind) or ("7" in kind)      # megacore / v7x
    # v4 / v5 / v6 have 128 MiB physical VMEM -> safe to raise the scoped limit.
    raise_vmem = any(t in kind for t in ("v4", "v5", "v6"))
    return (2 if two_tc else 1), (64 * 1024 * 1024 if raise_vmem else None)


def mlp_kernel(x_ref, w1_ref, b1_ref, w2_ref, b2_ref, w3_ref, b3_ref, o_ref):
    # x_ref: (block_b, 8) in the streaming dtype. Weights in PyTorch layout (out, in),
    # streaming dtype; biases (out, 1) f32.  All arithmetic is f32 (f32 accumulation on
    # the MXU, f32 bias/ReLU on the VPU); low precision is only used on the HBM wire.
    xt = x_ref[...].astype(jnp.float32).T                               # (8, block_b): batch on lanes
    h = jnp.dot(w1_ref[...].astype(jnp.float32), xt,
                preferred_element_type=jnp.float32)                     # (64, block_b)
    h = jnp.maximum(h + b1_ref[...], 0.0)
    h = jnp.dot(w2_ref[...].astype(jnp.float32), h,
                preferred_element_type=jnp.float32)                     # (32, block_b)
    h = jnp.maximum(h + b2_ref[...], 0.0)
    h = jnp.dot(w3_ref[...].astype(jnp.float32), h,
                preferred_element_type=jnp.float32)                     # (32, block_b) (rows 30,31 are pad)
    h = h + b3_ref[...]
    # Transpose back to row-major and drop the 2 padded rows -> (block_b, 30).
    o_ref[...] = h.T[:, :OUT_DIM].astype(o_ref.dtype)


def mlp_forward(x, w1, b1, w2, b2, w3, b3, *, block_b=None,
                compute_dtype=jnp.bfloat16, out_dtype=None):
    """relu(relu(x @ w1.T + b1) @ w2.T + b2) @ w3.T + b3, fused in one Pallas kernel.

    x: (B, 8). w_i: (out_features, in_features) PyTorch layout. b_i: (out_features,).
    compute_dtype: streaming dtype for x / weights (bf16 default halves input HBM bytes;
      best when x is already bf16 or the cast fuses upstream). Pass jnp.float32 / None
      for exact f32 streaming. Accumulation / bias / ReLU are always f32 in-kernel.
    out_dtype: output dtype; defaults to x's original dtype. bf16 is the fast path.
    """
    B = x.shape[0]
    if out_dtype is None:
        out_dtype = x.dtype                     # capture BEFORE any compute-dtype cast

    n_tc, vmem_limit = _tpu_topology()

    # ---- rows per grid step. Blocks never exceed B (block == B is a legal full-dim
    # block even if B is ragged); otherwise multiples of 8/128 with a masked tail. ----
    if block_b is None:
        if n_tc > 1 and B > LANE:
            cand = _round_up(pl.cdiv(B, n_tc), LANE)   # feed both TensorCores
        else:
            cand = B                                    # single TC: one big block if it fits
        block_b = max(1, min(cand, B, DEF_BLOCK_CAP))
    else:
        block_b = max(1, min(_round_up(int(block_b), 8), B))
    num_blocks = pl.cdiv(B, block_b)

    # ---- optional low-precision streaming of x / weights (biases stay f32) ----
    if compute_dtype is not None:
        x = x.astype(compute_dtype)
        w1, w2, w3 = (w.astype(compute_dtype) for w in (w1, w2, w3))

    # Tiny one-time weight prep (no per-row HBM cost): biases as (out, 1) f32 columns,
    # layer 3 padded from 30 to 32 rows so the final in-kernel transpose is 8-aligned.
    b1c = b1.reshape(H1, 1).astype(jnp.float32)
    b2c = b2.reshape(H2, 1).astype(jnp.float32)
    w3p = jnp.pad(w3, ((0, OUT_PAD - OUT_DIM), (0, 0)))
    b3c = jnp.pad(b3, (0, OUT_PAD - OUT_DIM)).reshape(OUT_PAD, 1).astype(jnp.float32)

    # Weights/biases (<20 KiB total) use constant block indices -> stay VMEM-resident
    # across all grid steps.  (Single-buffering them via pl.Buffered(1) would shave a
    # little more VMEM; skipped to keep the spec simple.)
    def full(shape):
        return pl.BlockSpec(shape, lambda i: (0, 0))

    def _nbytes(a):
        return a.size * jnp.dtype(a.dtype).itemsize

    bytes_in = _nbytes(x) + sum(_nbytes(a) for a in (w1, w2, w3p, b1c, b2c, b3c))
    bytes_out = B * OUT_DIM * jnp.dtype(out_dtype).itemsize
    cost = pl.CostEstimate(
        flops=2 * (IN_DIM * H1 + H1 * H2 + H2 * OUT_DIM) * B,
        transcendentals=0,
        bytes_accessed=bytes_in + bytes_out,
    )

    return pl.pallas_call(
        mlp_kernel,
        out_shape=jax.ShapeDtypeStruct((B, OUT_DIM), out_dtype),
        grid_spec=pltpu.PrefetchScalarGridSpec(
            num_scalar_prefetch=0,
            grid=(num_blocks,),
            in_specs=[
                pl.BlockSpec((block_b, IN_DIM), lambda i: (i, 0)),   # contiguous row-major x slab
                full((H1, IN_DIM)),
                full((H1, 1)),
                full((H2, H1)),
                full((H2, 1)),
                full((OUT_PAD, H2)),
                full((OUT_PAD, 1)),
            ],
            out_specs=pl.BlockSpec((block_b, OUT_DIM), lambda i: (i, 0)),
        ),
        compiler_params=pltpu.CompilerParams(
            dimension_semantics=("parallel",),       # batch axis shards across TCs on 2-TC chips
            vmem_limit_bytes=vmem_limit,
        ),
        cost_estimate=cost,
    )(x, w1, b1c, w2, b2c, w3p, b3c)


def init_params(key):
    """PyTorch-style init: U(-1/sqrt(fan_in), 1/sqrt(fan_in)), weights in (out, in) layout."""
    ks = jax.random.split(key, 6)

    def layer(kw, kb, fan_in, fan_out):
        bound = 1.0 / jnp.sqrt(fan_in)
        w = jax.random.uniform(kw, (fan_out, fan_in), jnp.float32, -bound, bound)
        b = jax.random.uniform(kb, (fan_out,), jnp.float32, -bound, bound)
        return w, b

    w1, b1 = layer(ks[0], ks[1], IN_DIM, H1)
    w2, b2 = layer(ks[2], ks[3], H1, H2)
    w3, b3 = layer(ks[4], ks[5], H2, OUT_DIM)
    return w1, b1, w2, b2, w3, b3


def ref_forward(x, w1, b1, w2, b2, w3, b3):
    h = jnp.maximum(x @ w1.T + b1, 0.0)
    h = jnp.maximum(h @ w2.T + b2, 0.0)
    return h @ w3.T + b3


if __name__ == "__main__":
    key = jax.random.PRNGKey(0)
    k_x, k_p = jax.random.split(key)
    params = init_params(k_p)

    # (1) exact f32 streaming, single block, tight tolerance
    B1 = 64
    x1 = jax.random.normal(k_x, (B1, IN_DIM), jnp.float32)
    out1 = jax.block_until_ready(mlp_forward(x1, *params, compute_dtype=jnp.float32))
    ref1 = ref_forward(x1, *params)
    assert out1.shape == (B1, OUT_DIM)
    assert jnp.allclose(out1, ref1, atol=1e-4, rtol=1e-4)

    # (2) ragged batch, multi-block grid with a masked partial tail, bf16 streaming
    B2 = 300
    x2 = jax.random.normal(k_x, (B2, IN_DIM), jnp.float32)
    out2 = jax.block_until_ready(mlp_forward(x2, *params, block_b=128))
    ref2 = ref_forward(x2, *params)
    assert out2.shape == (B2, OUT_DIM)
    assert jnp.allclose(out2, ref2, atol=5e-2, rtol=5e-2)

    # (3) default block heuristic (generation-aware) + bf16 output fast path
    out3 = jax.block_until_ready(mlp_forward(x2, *params, out_dtype=jnp.bfloat16))
    assert out3.shape == (B2, OUT_DIM) and out3.dtype == jnp.bfloat16
    assert jnp.allclose(out3.astype(jnp.float32), ref2, atol=1e-1, rtol=1e-1)

    print("KERNEL_OK")
</pallas_src>

<mosaic_0001>
module attributes {stable_mosaic.version = 11 : i64} {
  func.func @mlp_kernel(%arg0: i32, %arg1: memref<64x8xf32, #tpu.memory_space<vmem>>, %arg2: memref<64x8xf32, #tpu.memory_space<vmem>>, %arg3: memref<64x1xf32, #tpu.memory_space<vmem>>, %arg4: memref<32x64xf32, #tpu.memory_space<vmem>>, %arg5: memref<32x1xf32, #tpu.memory_space<vmem>>, %arg6: memref<32x32xf32, #tpu.memory_space<vmem>>, %arg7: memref<32x1xf32, #tpu.memory_space<vmem>>, %arg8: memref<64x30xf32, #tpu.memory_space<vmem>>) attributes {dimension_semantics = [#tpu.dimension_semantics<parallel>], iteration_bounds = array<i64: 1>, scalar_prefetch = 0 : i64, scratch_operands = 0 : i64, tpu.core_type = #tpu.core_type<tc>, window_params = [{transform_indices = @transform_0, window_bounds = array<i64: 64, 8>}, {pipeline_mode = #tpu.pipeline_mode<synchronous>, transform_indices = @transform_1, window_bounds = array<i64: 64, 8>}, {pipeline_mode = #tpu.pipeline_mode<synchronous>, transform_indices = @transform_2, window_bounds = array<i64: 64, 1>}, {pipeline_mode = #tpu.pipeline_mode<synchronous>, transform_indices = @transform_3, window_bounds = array<i64: 32, 64>}, {pipeline_mode = #tpu.pipeline_mode<synchronous>, transform_indices = @transform_4, window_bounds = array<i64: 32, 1>}, {pipeline_mode = #tpu.pipeline_mode<synchronous>, transform_indices = @transform_5, window_bounds = array<i64: 32, 32>}, {pipeline_mode = #tpu.pipeline_mode<synchronous>, transform_indices = @transform_6, window_bounds = array<i64: 32, 1>}, {transform_indices = @transform_7, window_bounds = array<i64: 64, 30>}]} {
    %c0 = arith.constant 0 : index
    %c0_0 = arith.constant 0 : index
    %0 = vector.load %arg1[%c0, %c0_0] : memref<64x8xf32, #tpu.memory_space<vmem>>, vector<64x8xf32>
    %1 = tpu.transpose %0, [1, 0] : vector<64x8xf32> -> vector<8x64xf32>
    %c0_1 = arith.constant 0 : index
    %c0_2 = arith.constant 0 : index
    %2 = vector.load %arg2[%c0_1, %c0_2] : memref<64x8xf32, #tpu.memory_space<vmem>>, vector<64x8xf32>
    %cst = arith.constant dense<0.000000e+00> : vector<64x64xf32>
    %3 = tpu.matmul %2, %1, %cst {dimension_numbers = #tpu.dot_dimension_numbers<[1], [0], [0], [1], [0, 0, 1, 1], [], []>} : vector<64x8xf32>, vector<8x64xf32>, vector<64x64xf32> -> vector<64x64xf32>
    %c0_3 = arith.constant 0 : index
    %c0_4 = arith.constant 0 : index
    %4 = vector.load %arg3[%c0_3, %c0_4] : memref<64x1xf32, #tpu.memory_space<vmem>>, vector<64x1xf32>
    %5 = vector.broadcast %4 : vector<64x1xf32> to vector<64x64xf32>
    %6 = arith.addf %3, %5 : vector<64x64xf32>
    %cst_5 = arith.constant 0.000000e+00 : f32
    %7 = vector.broadcast %cst_5 : f32 to vector<64x64xf32>
    %8 = arith.maximumf %6, %7 : vector<64x64xf32>
    %c0_6 = arith.constant 0 : index
    %c0_7 = arith.constant 0 : index
    %9 = vector.load %arg4[%c0_6, %c0_7] : memref<32x64xf32, #tpu.memory_space<vmem>>, vector<32x64xf32>
    %cst_8 = arith.constant dense<0.000000e+00> : vector<32x64xf32>
    %10 = tpu.matmul %9, %8, %cst_8 {dimension_numbers = #tpu.dot_dimension_numbers<[1], [0], [0], [1], [0, 0, 1, 1], [], []>} : vector<32x64xf32>, vector<64x64xf32>, vector<32x64xf32> -> vector<32x64xf32>
    %c0_9 = arith.constant 0 : index
    %c0_10 = arith.constant 0 : index
    %11 = vector.load %arg5[%c0_9, %c0_10] : memref<32x1xf32, #tpu.memory_space<vmem>>, vector<32x1xf32>
    %12 = vector.broadcast %11 : vector<32x1xf32> to vector<32x64xf32>
    %13 = arith.addf %10, %12 : vector<32x64xf32>
    %cst_11 = arith.constant 0.000000e+00 : f32
    %14 = vector.broadcast %cst_11 : f32 to vector<32x64xf32>
    %15 = arith.maximumf %13, %14 : vector<32x64xf32>
    %c0_12 = arith.constant 0 : index
    %c0_13 = arith.constant 0 : index
    %16 = vector.load %arg6[%c0_12, %c0_13] : memref<32x32xf32, #tpu.memory_space<vmem>>, vector<32x32xf32>
    %cst_14 = arith.constant dense<0.000000e+00> : vector<32x64xf32>
    %17 = tpu.matmul %16, %15, %cst_14 {dimension_numbers = #tpu.dot_dimension_numbers<[1], [0], [0], [1], [0, 0, 1, 1], [], []>} : vector<32x32xf32>, vector<32x64xf32>, vector<32x64xf32> -> vector<32x64xf32>
    %c0_15 = arith.constant 0 : index
    %c0_16 = arith.constant 0 : index
    %18 = vector.load %arg7[%c0_15, %c0_16] : memref<32x1xf32, #tpu.memory_space<vmem>>, vector<32x1xf32>
    %19 = vector.broadcast %18 : vector<32x1xf32> to vector<32x64xf32>
    %20 = arith.addf %17, %19 : vector<32x64xf32>
    %21 = tpu.transpose %20, [1, 0] : vector<32x64xf32> -> vector<64x32xf32>
    %22 = vector.extract_strided_slice %21 {offsets = [0, 0], sizes = [64, 30], strides = [1, 1]} : vector<64x32xf32> to vector<64x30xf32>
    %c0_17 = arith.constant 0 : index
    %c0_18 = arith.constant 0 : index
    %23 = vector.load %arg8[%c0_17, %c0_18] : memref<64x30xf32, #tpu.memory_space<vmem>>, vector<64x30xf32>
    tpu.vector_store %arg8[%c0_17, %c0_18], %22 {strides = array<i32>} : memref<64x30xf32, #tpu.memory_space<vmem>>, vector<64x30xf32>,
    return
  }
  func.func @transform_0(%arg0: i32) -> (i32, i32) {
    %c0_i32 = arith.constant 0 : i32
    %c0_i32_0 = arith.constant 0 : i32
    return %arg0, %c0_i32 : i32, i32
  }
  func.func @transform_1(%arg0: i32) -> (i32, i32) {
    %c0_i32 = arith.constant 0 : i32
    %c0_i32_0 = arith.constant 0 : i32
    %c0_i32_1 = arith.constant 0 : i32
    return %c0_i32, %c0_i32_0 : i32, i32
  }
  func.func @transform_2(%arg0: i32) -> (i32, i32) {
    %c0_i32 = arith.constant 0 : i32
    %c0_i32_0 = arith.constant 0 : i32
    %c0_i32_1 = arith.constant 0 : i32
    return %c0_i32, %c0_i32_0 : i32, i32
  }
  func.func @transform_3(%arg0: i32) -> (i32, i32) {
    %c0_i32 = arith.constant 0 : i32
    %c0_i32_0 = arith.constant 0 : i32
    %c0_i32_1 = arith.constant 0 : i32
    return %c0_i32, %c0_i32_0 : i32, i32
  }
  func.func @transform_4(%arg0: i32) -> (i32, i32) {
    %c0_i32 = arith.constant 0 : i32
    %c0_i32_0 = arith.constant 0 : i32
    %c0_i32_1 = arith.constant 0 : i32
    return %c0_i32, %c0_i32_0 : i32, i32
  }
  func.func @transform_5(%arg0: i32) -> (i32, i32) {
    %c0_i32 = arith.constant 0 : i32
    %c0_i32_0 = arith.constant 0 : i32
    %c0_i32_1 = arith.constant 0 : i32
    return %c0_i32, %c0_i32_0 : i32, i32
  }
  func.func @transform_6(%arg0: i32) -> (i32, i32) {
    %c0_i32 = arith.constant 0 : i32
    %c0_i32_0 = arith.constant 0 : i32
    %c0_i32_1 = arith.constant 0 : i32
    return %c0_i32, %c0_i32_0 : i32, i32
  }
  func.func @transform_7(%arg0: i32) -> (i32, i32) {
    %c0_i32 = arith.constant 0 : i32
    %c0_i32_0 = arith.constant 0 : i32
    return %arg0, %c0_i32 : i32, i32
  }
}

</mosaic_0001>

<llo_original>
// kernel: tpu_custom_call.1
$region0: #{tpu_custom_call.1}
  #allocation0 [shape = 'u32[]', space=smem, size = 0x4, offset = 0x4, fixed_abs, tag = 'smem constant byte address 0x4 - core index']
  #allocation1 [shape = 'u32[144,128]{1,0:T(1,128)}', space=vmem, size = 0x12000, scoped, tag = 'internal scratch']
  %s0 = inlined_call_operand.vmem [shape: f32[64,8], index: 0, kind: input, shape index: {}]
  %s1 = inlined_call_operand.vmem [shape: f32[64,8], index: 1, kind: input, shape index: {}]
  %s2 = inlined_call_operand.vmem [shape: f32[64,1], index: 2, kind: input, shape index: {}]
  %s3 = inlined_call_operand.vmem [shape: f32[32,64], index: 3, kind: input, shape index: {}]
  %s4 = inlined_call_operand.vmem [shape: f32[32,1], index: 4, kind: input, shape index: {}]
  %s5 = inlined_call_operand.vmem [shape: f32[32,32], index: 5, kind: input, shape index: {}]
  %s6 = inlined_call_operand.vmem [shape: f32[32,1], index: 6, kind: input, shape index: {}]
  %s7 = inlined_call_operand.vmem [shape: f32[64,30], index: 7, kind: output, shape index: {}]
  %s8 = sld [smem:[#allocation0]]
  $region38: #{tpu_custom_call.1} parent=0
    _
  %s10 = ssub.s32 1, %s8
  %s11 = scalar_select 0, %s10, %s8
  // Predicated region
  $region2: #{tpu_custom_call.1} parent=0 // pred_check
    _
  $region3: #{tpu_custom_call.1} parent=0 // pred_check_branch
    %13 = sbr.rel (0) target = $region5
  $region4: #{tpu_custom_call.1} parent=0 // pred_region
    _
  $region5: #{tpu_custom_call.1} parent=0 // pred_fallthru
    _
  // Predicated region
  $region6: #{tpu_custom_call.1} parent=0 // pred_check
    _
  $region7: #{tpu_custom_call.1} parent=0 // pred_check_branch
    %15 = sbr.rel (0) target = $region9
  $region8: #{tpu_custom_call.1} parent=0 // pred_region
    _
  $region9: #{tpu_custom_call.1} parent=0 // pred_fallthru
    _
  // Predicated region
  $region10: #{tpu_custom_call.1} parent=0 // pred_check
    _
  $region11: #{tpu_custom_call.1} parent=0 // pred_check_branch
    %17 = sbr.rel (0) target = $region13
  $region12: #{tpu_custom_call.1} parent=0 // pred_region
    _
  $region13: #{tpu_custom_call.1} parent=0 // pred_fallthru
    _
  // Predicated region
  $region14: #{tpu_custom_call.1} parent=0 // pred_check
    _
  $region15: #{tpu_custom_call.1} parent=0 // pred_check_branch
    %19 = sbr.rel (0) target = $region17
  $region16: #{tpu_custom_call.1} parent=0 // pred_region
    _
  $region17: #{tpu_custom_call.1} parent=0 // pred_fallthru
    _
  // Predicated region
  $region18: #{tpu_custom_call.1} parent=0 // pred_check
    _
  $region19: #{tpu_custom_call.1} parent=0 // pred_check_branch
    %21 = sbr.rel (0) target = $region21
  $region20: #{tpu_custom_call.1} parent=0 // pred_region
    _
  $region21: #{tpu_custom_call.1} parent=0 // pred_fallthru
    _
  // Predicated region
  $region22: #{tpu_custom_call.1} parent=0 // pred_check
    _
  $region23: #{tpu_custom_call.1} parent=0 // pred_check_branch
    %23 = sbr.rel (0) target = $region25
  $region24: #{tpu_custom_call.1} parent=0 // pred_region
    _
  $region25: #{tpu_custom_call.1} parent=0 // pred_fallthru
    _
  // Predicated region
  $region26: #{tpu_custom_call.1} parent=0 // pred_check
    _
  $region27: #{tpu_custom_call.1} parent=0 // pred_check_branch
    %25 = sbr.rel (0) target = $region29
  $region28: #{tpu_custom_call.1} parent=0 // pred_region
    _
  $region29: #{tpu_custom_call.1} parent=0 // pred_fallthru
    _
  %v26 = vld [vmem:[%s0] sm:$0xff]
  %v27 = vld [vmem:[%s0 + $0x8] sm:$0xff]
  %v28 = vld [vmem:[%s0 + $0x10] sm:$0xff]
  %v29 = vld [vmem:[%s0 + $0x18] sm:$0xff]
  %v30 = vld [vmem:[%s0 + $0x20] sm:$0xff]
  %v31 = vld [vmem:[%s0 + $0x28] sm:$0xff]
  %v32 = vld [vmem:[%s0 + $0x30] sm:$0xff]
  %v33 = vld [vmem:[%s0 + $0x38] sm:$0xff]
  %v34 = vld [vmem:[%s1] sm:$0xff]
  %v35 = vld [vmem:[%s1 + $0x8] sm:$0xff]
  %v36 = vld [vmem:[%s1 + $0x10] sm:$0xff]
  %v37 = vld [vmem:[%s1 + $0x18] sm:$0xff]
  %v38 = vld [vmem:[%s1 + $0x20] sm:$0xff]
  %v39 = vld [vmem:[%s1 + $0x28] sm:$0xff]
  %v40 = vld [vmem:[%s1 + $0x30] sm:$0xff]
  %v41 = vld [vmem:[%s1 + $0x38] sm:$0xff]
  %v42 = vld [vmem:[%s2] sm:$0xff]
  %v43 = vld [vmem:[%s2 + $0x8] sm:$0xff]
  %v44 = vld [vmem:[%s2 + $0x10] sm:$0xff]
  %v45 = vld [vmem:[%s2 + $0x18] sm:$0xff]
  %v46 = vld [vmem:[%s2 + $0x20] sm:$0xff]
  %v47 = vld [vmem:[%s2 + $0x28] sm:$0xff]
  %v48 = vld [vmem:[%s2 + $0x30] sm:$0xff]
  %v49 = vld [vmem:[%s2 + $0x38] sm:$0xff]
  %51 = vset.pattern.permute.xlu0 0
  %52 = vperm.xlu0 %51, %v42
  %v53 = vpop.permute.xlu0 %52
  %56 = vset.pattern.permute.xlu0 0
  %57 = vperm.xlu0 %56, %v43
  %v58 = vpop.permute.xlu0 %57
  %61 = vset.pattern.permute.xlu0 0
  %62 = vperm.xlu0 %61, %v44
  %v63 = vpop.permute.xlu0 %62
  %66 = vset.pattern.permute.xlu0 0
  %67 = vperm.xlu0 %66, %v45
  %v68 = vpop.permute.xlu0 %67
  %71 = vset.pattern.permute.xlu0 0
  %72 = vperm.xlu0 %71, %v46
  %v73 = vpop.permute.xlu0 %72
  %76 = vset.pattern.permute.xlu0 0
  %77 = vperm.xlu0 %76, %v47
  %v78 = vpop.permute.xlu0 %77
  %81 = vset.pattern.permute.xlu0 0
  %82 = vperm.xlu0 %81, %v48
  %v83 = vpop.permute.xlu0 %82
  %86 = vset.pattern.permute.xlu0 0
  %87 = vperm.xlu0 %86, %v49
  %v88 = vpop.permute.xlu0 %87
  %vm90 = vcmask 64512
  %v92 = vsel %vm90, %v34, 0
  %v95 = vsel %vm90, %v35, 0
  %v98 = vsel %vm90, %v36, 0
  %v101 = vsel %vm90, %v37, 0
  %v104 = vsel %vm90, %v38, 0
  %v107 = vsel %vm90, %v39, 0
  %v110 = vsel %vm90, %v40, 0
  %v113 = vsel %vm90, %v41, 0
  %v116 = vsel %vm90, %v26, 0
  %v119 = vsel %vm90, %v27, 0
  %v122 = vsel %vm90, %v28, 0
  %v125 = vsel %vm90, %v29, 0
  %v128 = vsel %vm90, %v30, 0
  %v131 = vsel %vm90, %v31, 0
  %v134 = vsel %vm90, %v32, 0
  %v137 = vsel %vm90, %v33, 0
  %139 = vmatprep.subr.mxu0 0.0
  %140 = vmatpush1.xpose.msra.mxu0 %v116
  %141 = vmatprep.subr.mxu0 0.0
  %142 = vmatpush1.xpose.msra.mxu0 %v119
  %143 = vmatprep.subr.mxu0 0.0
  %144 = vmatpush1.xpose.msra.mxu0 %v122
  %145 = vmatprep.subr.mxu0 0.0
  %146 = vmatpush1.xpose.msra.mxu0 %v125
  %147 = vmatprep.subr.mxu0 0.0
  %148 = vmatpush1.xpose.msra.mxu0 %v128
  %149 = vmatprep.subr.mxu0 0.0
  %150 = vmatpush1.xpose.msra.mxu0 %v131
  %151 = vmatprep.subr.mxu0 0.0
  %152 = vmatpush1.xpose.msra.mxu0 %v134
  %153 = vmatprep.subr.mxu0 0.0
  %154 = vmatpush1.xpose.msra.mxu0 %v137
  %155 = vmatprep.subr.mxu0 0.0
  %156 = vmatpush1.xpose.msra.mxu0 0.0
  %157 = vmatprep.subr.mxu0 0.0
  %158 = vmatpush1.xpose.msra.mxu0 0.0
  %159 = vmatprep.subr.mxu0 0.0
  %160 = vmatpush1.xpose.msra.mxu0 0.0
  %161 = vmatprep.subr.mxu0 0.0
  %162 = vmatpush1.xpose.msra.mxu0 0.0
  %163 = vmatprep.subr.mxu0 0.0
  %164 = vmatpush1.xpose.msra.mxu0 0.0
  %165 = vmatprep.subr.mxu0 0.0
  %166 = vmatpush1.xpose.msra.mxu0 0.0
  %167 = vmatprep.subr.mxu0 0.0
  %168 = vmatpush1.xpose.msra.mxu0 0.0
  %169 = vmatprep.subr.mxu0 0.0
  %170 = vmatpush1.xpose.msra.mxu0 0.0
  %171 = vmatprep.subr.mxu0 0.0
  %172 = vmatpush1.xpose.msra.mxu0 0.0
  %173 = vmatprep.subr.mxu0 0.0
  %174 = vmatpush1.xpose.msra.mxu0 0.0
  %175 = vmatprep.subr.mxu0 0.0
  %176 = vmatpush1.xpose.msra.mxu0 0.0
  %177 = vmatprep.subr.mxu0 0.0
  %178 = vmatpush1.xpose.msra.mxu0 0.0
  %179 = vmatprep.subr.mxu0 0.0
  %180 = vmatpush1.xpose.msra.mxu0 0.0
  %181 = vmatprep.subr.mxu0 0.0
  %182 = vmatpush1.xpose.msra.mxu0 0.0
  %183 = vmatprep.subr.mxu0 0.0
  %184 = vmatpush1.xpose.msra.mxu0 0.0
  %185 = vmatprep.subr.mxu0 0.0
  %186 = vmatpush1.xpose.msra.mxu0 0.0
  %187 = vmatprep.subr.mxu0 0.0
  %188 = vmatpush1.xpose.msra.mxu0 0.0
  %189 = vmatprep.subr.mxu0 0.0
  %190 = vmatpush1.xpose.msra.mxu0 0.0
  %191 = vmatprep.subr.mxu0 0.0
  %192 = vmatpush1.xpose.msra.mxu0 0.0
  %193 = vmatprep.subr.mxu0 0.0
  %194 = vmatpush1.xpose.msra.mxu0 0.0
  %195 = vmatprep.subr.mxu0 0.0
  %196 = vmatpush1.xpose.msra.mxu0 0.0
  %197 = vmatprep.subr.mxu0 0.0
  %198 = vmatpush1.xpose.msra.mxu0 0.0
  %199 = vmatprep.subr.mxu0 0.0
  %200 = vmatpush1.xpose.msra.mxu0 0.0
  %201 = vmatprep.subr.mxu0 0.0
  %202 = vmatpush1.xpose.msra.mxu0 0.0
  %203 = vmatprep.mubr.f32.mxu0 0.0
  %204 = vmatmul.mubr.f32.gmra.mrb[0].mxu0 %v92
  %v205 = vpop.f32.mrb[0].mxu0
  %v206 = vadd.f32 %v53, %v205
  %v207 = vpop.f32.mrb[0].mxu0
  %208 = vmatprep.mubr.f32.mxu0 0.0
  %209 = vmatmul.mubr.f32.gmra.mrb[0].mxu0 %v95
  %v210 = vpop.f32.mrb[0].mxu0
  %v211 = vadd.f32 %v58, %v210
  %v212 = vpop.f32.mrb[0].mxu0
  %213 = vmatprep.mubr.f32.mxu0 0.0
  %214 = vmatmul.mubr.f32.gmra.mrb[0].mxu0 %v98
  %v215 = vpop.f32.mrb[0].mxu0
  %v216 = vadd.f32 %v63, %v215
  %v217 = vpop.f32.mrb[0].mxu0
  %218 = vmatprep.mubr.f32.mxu0 0.0
  %219 = vmatmul.mubr.f32.gmra.mrb[0].mxu0 %v101
  %v220 = vpop.f32.mrb[0].mxu0
  %v221 = vadd.f32 %v68, %v220
  %v222 = vpop.f32.mrb[0].mxu0
  %223 = vmatprep.mubr.f32.mxu0 0.0
  %224 = vmatmul.mubr.f32.gmra.mrb[0].mxu0 %v104
  %v225 = vpop.f32.mrb[0].mxu0
  %v226 = vadd.f32 %v73, %v225
  %v227 = vpop.f32.mrb[0].mxu0
  %228 = vmatprep.mubr.f32.mxu0 0.0
  %229 = vmatmul.mubr.f32.gmra.mrb[0].mxu0 %v107
  %v230 = vpop.f32.mrb[0].mxu0
  %v231 = vadd.f32 %v78, %v230
  %v232 = vpop.f32.mrb[0].mxu0
  %233 = vmatprep.mubr.f32.mxu0 0.0
  %234 = vmatmul.mubr.f32.gmra.mrb[0].mxu0 %v110
  %v235 = vpop.f32.mrb[0].mxu0
  %v236 = vadd.f32 %v83, %v235
  %v237 = vpop.f32.mrb[0].mxu0
  %238 = vmatprep.mubr.f32.mxu0 0.0
  %239 = vmatmul.mubr.f32.gmra.mrb[0].mxu0 %v113
  %v240 = vpop.f32.mrb[0].mxu0
  %v241 = vadd.f32 %v88, %v240
  %v242 = vpop.f32.mrb[0].mxu0
  %243 = vdwg.mxu0
  %v244 = vmax.f32 %v206, 0.0
  %v245 = vmax.f32 %v211, 0.0
  %v246 = vmax.f32 %v216, 0.0
  %v247 = vmax.f32 %v221, 0.0
  %v248 = vmax.f32 %v226, 0.0
  %v249 = vmax.f32 %v231, 0.0
  %v250 = vmax.f32 %v236, 0.0
  %v251 = vmax.f32 %v241, 0.0
  %v252 = vld [vmem:[%s3] sm:$0xff]
  %v253 = vld [vmem:[%s3 + $0x8] sm:$0xff]
  %v254 = vld [vmem:[%s3 + $0x10] sm:$0xff]
  %v255 = vld [vmem:[%s3 + $0x18] sm:$0xff]
  %v256 = vld [vmem:[%s4] sm:$0xff]
  %v257 = vld [vmem:[%s4 + $0x8] sm:$0xff]
  %v258 = vld [vmem:[%s4 + $0x10] sm:$0xff]
  %v259 = vld [vmem:[%s4 + $0x18] sm:$0xff]
  %261 = vset.pattern.permute.xlu0 0
  %262 = vperm.xlu0 %261, %v256
  %v263 = vpop.permute.xlu0 %262
  %266 = vset.pattern.permute.xlu0 0
  %267 = vperm.xlu0 %266, %v257
  %v268 = vpop.permute.xlu0 %267
  %271 = vset.pattern.permute.xlu0 0
  %272 = vperm.xlu0 %271, %v258
  %v273 = vpop.permute.xlu0 %272
  %276 = vset.pattern.permute.xlu0 0
  %277 = vperm.xlu0 %276, %v259
  %v278 = vpop.permute.xlu0 %277
  %vm280 = vcmask 523264
  %v282 = vsel %vm280, %v252, 0
  %v285 = vsel %vm280, %v253, 0
  %v288 = vsel %vm280, %v254, 0
  %v291 = vsel %vm280, %v255, 0
  %293 = vmatprep.subr.mxu0 0.0
  %294 = vmatpush1.msra.mxu0 %v244
  %295 = vmatprep.subr.mxu0 0.0
  %296 = vmatpush1.msra.mxu0 %v245
  %297 = vmatprep.subr.mxu0 0.0
  %298 = vmatpush1.msra.mxu0 %v246
  %299 = vmatprep.subr.mxu0 0.0
  %300 = vmatpush1.msra.mxu0 %v247
  %301 = vmatprep.subr.mxu0 0.0
  %302 = vmatpush1.msra.mxu0 %v248
  %303 = vmatprep.subr.mxu0 0.0
  %304 = vmatpush1.msra.mxu0 %v249
  %305 = vmatprep.subr.mxu0 0.0
  %306 = vmatpush1.msra.mxu0 %v250
  %307 = vmatprep.subr.mxu0 0.0
  %308 = vmatpush1.msra.mxu0 %v251
  %309 = vmatprep.subr.mxu0 0.0
  %310 = vmatpush1.msra.mxu0 0.0
  %311 = vmatprep.subr.mxu0 0.0
  %312 = vmatpush1.msra.mxu0 0.0
  %313 = vmatprep.subr.mxu0 0.0
  %314 = vmatpush1.msra.mxu0 0.0
  %315 = vmatprep.subr.mxu0 0.0
  %316 = vmatpush1.msra.mxu0 0.0
  %317 = vmatprep.subr.mxu0 0.0
  %318 = vmatpush1.msra.mxu0 0.0
  %319 = vmatprep.subr.mxu0 0.0
  %320 = vmatpush1.msra.mxu0 0.0
  %321 = vmatprep.subr.mxu0 0.0
  %322 = vmatpush1.msra.mxu0 0.0
  %323 = vmatprep.subr.mxu0 0.0
  %324 = vmatpush1.msra.mxu0 0.0
  %325 = vmatprep.subr.mxu0 0.0
  %326 = vmatpush1.msra.mxu0 0.0
  %327 = vmatprep.subr.mxu0 0.0
  %328 = vmatpush1.msra.mxu0 0.0
  %329 = vmatprep.subr.mxu0 0.0
  %330 = vmatpush1.msra.mxu0 0.0
  %331 = vmatprep.subr.mxu0 0.0
  %332 = vmatpush1.msra.mxu0 0.0
  %333 = vmatprep.subr.mxu0 0.0
  %334 = vmatpush1.msra.mxu0 0.0
  %335 = vmatprep.subr.mxu0 0.0
  %336 = vmatpush1.msra.mxu0 0.0
  %337 = vmatprep.subr.mxu0 0.0
  %338 = vmatpush1.msra.mxu0 0.0
  %339 = vmatprep.subr.mxu0 0.0
  %340 = vmatpush1.msra.mxu0 0.0
  %341 = vmatprep.subr.mxu0 0.0
  %342 = vmatpush1.msra.mxu0 0.0
  %343 = vmatprep.subr.mxu0 0.0
  %344 = vmatpush1.msra.mxu0 0.0
  %345 = vmatprep.subr.mxu0 0.0
  %346 = vmatpush1.msra.mxu0 0.0
  %347 = vmatprep.subr.mxu0 0.0
  %348 = vmatpush1.msra.mxu0 0.0
  %349 = vmatprep.subr.mxu0 0.0
  %350 = vmatpush1.msra.mxu0 0.0
  %351 = vmatprep.subr.mxu0 0.0
  %352 = vmatpush1.msra.mxu0 0.0
  %353 = vmatprep.subr.mxu0 0.0
  %354 = vmatpush1.msra.mxu0 0.0
  %355 = vmatprep.subr.mxu0 0.0
  %356 = vmatpush1.msra.mxu0 0.0
  %357 = vmatprep.mubr.f32.mxu0 0.0
  %358 = vmatmul.mubr.f32.gmra.mrb[0].mxu0 %v282
  %v359 = vpop.f32.mrb[0].mxu0
  %v360 = vadd.f32 %v263, %v359
  %v361 = vpop.f32.mrb[0].mxu0
  %362 = vmatprep.mubr.f32.mxu0 0.0
  %363 = vmatmul.mubr.f32.gmra.mrb[0].mxu0 %v285
  %v364 = vpop.f32.mrb[0].mxu0
  %v365 = vadd.f32 %v268, %v364
  %v366 = vpop.f32.mrb[0].mxu0
  %367 = vmatprep.mubr.f32.mxu0 0.0
  %368 = vmatmul.mubr.f32.gmra.mrb[0].mxu0 %v288
  %v369 = vpop.f32.mrb[0].mxu0
  %v370 = vadd.f32 %v273, %v369
  %v371 = vpop.f32.mrb[0].mxu0
  %372 = vmatprep.mubr.f32.mxu0 0.0
  %373 = vmatmul.mubr.f32.gmra.mrb[0].mxu0 %v291
  %v374 = vpop.f32.mrb[0].mxu0
  %v375 = vadd.f32 %v278, %v374
  %v376 = vpop.f32.mrb[0].mxu0
  %377 = vdwg.mxu0
  %v378 = vmax.f32 %v360, 0.0
  %v379 = vmax.f32 %v365, 0.0
  %v380 = vmax.f32 %v370, 0.0
  %v381 = vmax.f32 %v375, 0.0
  %v382 = vld [vmem:[%s5] sm:$0xff]
  %v383 = vld [vmem:[%s5 + $0x8] sm:$0xff]
  %v384 = vld [vmem:[%s5 + $0x10] sm:$0xff]
  %v385 = vld [vmem:[%s5 + $0x18] sm:$0xff]
  %v386 = vld [vmem:[%s6] sm:$0xff]
  %v387 = vld [vmem:[%s6 + $0x8] sm:$0xff]
  %v388 = vld [vmem:[%s6 + $0x10] sm:$0xff]
  %v389 = vld [vmem:[%s6 + $0x18] sm:$0xff]
  %391 = vset.pattern.permute.xlu0 0
  %392 = vperm.xlu0 %391, %v386
  %v393 = vpop.permute.xlu0 %392
  %396 = vset.pattern.permute.xlu0 0
  %397 = vperm.xlu0 %396, %v387
  %v398 = vpop.permute.xlu0 %397
  %401 = vset.pattern.permute.xlu0 0
  %402 = vperm.xlu0 %401, %v388
  %v403 = vpop.permute.xlu0 %402
  %406 = vset.pattern.permute.xlu0 0
  %407 = vperm.xlu0 %406, %v389
  %v408 = vpop.permute.xlu0 %407
  %vm410 = vcmask 261120
  %v412 = vsel %vm410, %v382, 0
  %v415 = vsel %vm410, %v383, 0
  %v418 = vsel %vm410, %v384, 0
  %v421 = vsel %vm410, %v385, 0
  %423 = vmatprep.subr.mxu0 0.0
  %424 = vmatpush1.msra.mxu0 %v378
  %425 = vmatprep.subr.mxu0 0.0
  %426 = vmatpush1.msra.mxu0 %v379
  %427 = vmatprep.subr.mxu0 0.0
  %428 = vmatpush1.msra.mxu0 %v380
  %429 = vmatprep.subr.mxu0 0.0
  %430 = vmatpush1.msra.mxu0 %v381
  %431 = vmatprep.subr.mxu0 0.0
  %432 = vmatpush1.msra.mxu0 0.0
  %433 = vmatprep.subr.mxu0 0.0
  %434 = vmatpush1.msra.mxu0 0.0
  %435 = vmatprep.subr.mxu0 0.0
  %436 = vmatpush1.msra.mxu0 0.0
  %437 = vmatprep.subr.mxu0 0.0
  %438 = vmatpush1.msra.mxu0 0.0
  %439 = vmatprep.subr.mxu0 0.0
  %440 = vmatpush1.msra.mxu0 0.0
  %441 = vmatprep.subr.mxu0 0.0
  %442 = vmatpush1.msra.mxu0 0.0
  %443 = vmatprep.subr.mxu0 0.0
  %444 = vmatpush1.msra.mxu0 0.0
  %445 = vmatprep.subr.mxu0 0.0
  %446 = vmatpush1.msra.mxu0 0.0
  %447 = vmatprep.subr.mxu0 0.0
  %448 = vmatpush1.msra.mxu0 0.0
  %449 = vmatprep.subr.mxu0 0.0
  %450 = vmatpush1.msra.mxu0 0.0
  %451 = vmatprep.subr.mxu0 0.0
  %452 = vmatpush1.msra.mxu0 0.0
  %453 = vmatprep.subr.mxu0 0.0
  %454 = vmatpush1.msra.mxu0 0.0
  %455 = vmatprep.subr.mxu0 0.0
  %456 = vmatpush1.msra.mxu0 0.0
  %457 = vmatprep.subr.mxu0 0.0
  %458 = vmatpush1.msra.mxu0 0.0
  %459 = vmatprep.subr.mxu0 0.0
  %460 = vmatpush1.msra.mxu0 0.0
  %461 = vmatprep.subr.mxu0 0.0
  %462 = vmatpush1.msra.mxu0 0.0
  %463 = vmatprep.subr.mxu0 0.0
  %464 = vmatpush1.msra.mxu0 0.0
  %465 = vmatprep.subr.mxu0 0.0
  %466 = vmatpush1.msra.mxu0 0.0
  %467 = vmatprep.subr.mxu0 0.0
  %468 = vmatpush1.msra.mxu0 0.0
  %469 = vmatprep.subr.mxu0 0.0
  %470 = vmatpush1.msra.mxu0 0.0
  %471 = vmatprep.subr.mxu0 0.0
  %472 = vmatpush1.msra.mxu0 0.0
  %473 = vmatprep.subr.mxu0 0.0
  %474 = vmatpush1.msra.mxu0 0.0
  %475 = vmatprep.subr.mxu0 0.0
  %476 = vmatpush1.msra.mxu0 0.0
  %477 = vmatprep.subr.mxu0 0.0
  %478 = vmatpush1.msra.mxu0 0.0
  %479 = vmatprep.subr.mxu0 0.0
  %480 = vmatpush1.msra.mxu0 0.0
  %481 = vmatprep.subr.mxu0 0.0
  %482 = vmatpush1.msra.mxu0 0.0
  %483 = vmatprep.subr.mxu0 0.0
  %484 = vmatpush1.msra.mxu0 0.0
  %485 = vmatprep.subr.mxu0 0.0
  %486 = vmatpush1.msra.mxu0 0.0
  %487 = vmatprep.mubr.f32.mxu0 0.0
  %488 = vmatmul.mubr.f32.gmra.mrb[0].mxu0 %v412
  %v489 = vpop.f32.mrb[0].mxu0
  %v490 = vadd.f32 %v393, %v489
  %v491 = vpop.f32.mrb[0].mxu0
  %492 = vmatprep.mubr.f32.mxu0 0.0
  %493 = vmatmul.mubr.f32.gmra.mrb[0].mxu0 %v415
  %v494 = vpop.f32.mrb[0].mxu0
  %v495 = vadd.f32 %v398, %v494
  %v496 = vpop.f32.mrb[0].mxu0
  %497 = vmatprep.mubr.f32.mxu0 0.0
  %498 = vmatmul.mubr.f32.gmra.mrb[0].mxu0 %v418
  %v499 = vpop.f32.mrb[0].mxu0
  %v500 = vadd.f32 %v403, %v499
  %v501 = vpop.f32.mrb[0].mxu0
  %502 = vmatprep.mubr.f32.mxu0 0.0
  %503 = vmatmul.mubr.f32.gmra.mrb[0].mxu0 %v421
  %v504 = vpop.f32.mrb[0].mxu0
  %v505 = vadd.f32 %v408, %v504
  %v506 = vpop.f32.mrb[0].mxu0
  %507 = vdwg.mxu0
  %508 = vxpose.xlu0.b32.start [1/16] %v490, 128
  %509 = vxpose.xlu0.b32.cont [2/16] %v495, 128
  %510 = vxpose.xlu0.b32.cont [3/16] %v500, 128
  %511 = vxpose.xlu0.b32.cont [4/16] %v505, 128
  %512 = vxpose.xlu0.b32.cont [5/16] 0.0, 128
  %513 = vxpose.xlu0.b32.cont [6/16] 0.0, 128
  %514 = vxpose.xlu0.b32.cont [7/16] 0.0, 128
  %515 = vxpose.xlu0.b32.cont [8/16] 0.0, 128
  %516 = vxpose.xlu0.b32.cont [9/16] 0.0, 128
  %517 = vxpose.xlu0.b32.cont [10/16] 0.0, 128
  %518 = vxpose.xlu0.b32.cont [11/16] 0.0, 128
  %519 = vxpose.xlu0.b32.cont [12/16] 0.0, 128
  %520 = vxpose.xlu0.b32.cont [13/16] 0.0, 128
  %521 = vxpose.xlu0.b32.cont [14/16] 0.0, 128
  %522 = vxpose.xlu0.b32.cont [15/16] 0.0, 128
  %523 = vxpose.xlu0.b32.end [16/16] 0.0, 128
  %v524 = vpop.trf.xlu0
  %v525 = vpop.trf.xlu0
  %v526 = vpop.trf.xlu0
  %v527 = vpop.trf.xlu0
  %v528 = vpop.trf.xlu0
  %v529 = vpop.trf.xlu0
  %v530 = vpop.trf.xlu0
  %v531 = vpop.trf.xlu0
  %v532 = vpop.trf.xlu0
  %v533 = vpop.trf.xlu0
  %v534 = vpop.trf.xlu0
  %v535 = vpop.trf.xlu0
  %v536 = vpop.trf.xlu0
  %v537 = vpop.trf.xlu0
  %v538 = vpop.trf.xlu0
  %v539 = vpop.trf.xlu0
  %vm540 = vcmask 244736
  %541 = vst.msk [vmem:[%s7] sm:$0xff] %vm540, %v524
  %542 = vst.msk [vmem:[%s7 + $0x8] sm:$0xff] %vm540, %v525
  %543 = vst.msk [vmem:[%s7 + $0x10] sm:$0xff] %vm540, %v526
  %544 = vst.msk [vmem:[%s7 + $0x18] sm:$0xff] %vm540, %v527
  %545 = vst.msk [vmem:[%s7 + $0x20] sm:$0xff] %vm540, %v528
  %546 = vst.msk [vmem:[%s7 + $0x28] sm:$0xff] %vm540, %v529
  %547 = vst.msk [vmem:[%s7 + $0x30] sm:$0xff] %vm540, %v530
  %548 = vst.msk [vmem:[%s7 + $0x38] sm:$0xff] %vm540, %v531
  // Predicated region
  $region30: #{tpu_custom_call.1} parent=0 // pred_check
    _
  $region31: #{tpu_custom_call.1} parent=0 // pred_check_branch
    %550 = sbr.rel (0) target = $region33
  $region32: #{tpu_custom_call.1} parent=0 // pred_region
    _
  $region33: #{tpu_custom_call.1} parent=0 // pred_fallthru
    _
  // Predicated region
  $region34: #{tpu_custom_call.1} parent=0 // pred_check
    _
  $region35: #{tpu_custom_call.1} parent=0 // pred_check_branch
    %552 = sbr.rel (0) target = $region37
  $region36: #{tpu_custom_call.1} parent=0 // pred_region
    _
  $region37: #{tpu_custom_call.1} parent=0 // pred_fallthru
    _

</llo_original>
